<compile_context>
chip_gen: v7x
topology: tpu7x:2x2x1
jax: 0.10.0
libtpu: 0.0.40
codegen_flags: <defaults>
</compile_context>

<pallas_src>
import jax
import jax.numpy as jnp
from jax.experimental import pallas as pl
from jax.experimental.pallas import tpu as pltpu

BN_EPS = 1e-5


def classblock_kernel(x_ref, w1_ref, b1_ref, w2_ref, b2_ref, out_ref):
    # Cast the streamed activation tile to the compute dtype inside VMEM
    # (avoids a wrapper-side HBM round trip; x is read from HBM exactly once).
    x = x_ref[...].astype(w1_ref.dtype)

    # ---- add_block: Linear (eval-mode BatchNorm1d already folded into w1/b1) ----
    h = jnp.dot(x, w1_ref[...], preferred_element_type=jnp.float32)
    h = h + b1_ref[...]                       # [tb, NB] + [1, NB], f32 on the VPU

    # ---- add_block: Dropout -> identity in eval mode ----
    # TODO(synk): training-mode dropout (pltpu.prng_* Bernoulli mask) and
    # batch-statistics BatchNorm are intentionally not implemented (eval-only).

    # ---- classifier: Linear(num_bottleneck -> class tile) ----
    out = jnp.dot(h.astype(w2_ref.dtype), w2_ref[...],
                  preferred_element_type=jnp.float32)
    out_ref[...] = (out + b2_ref[...]).astype(out_ref.dtype)


def _round_up(n, m):
    return ((n + m - 1) // m) * m


def class_block_forward(x, params, *, tile_b=512, tile_c=2048,
                        compute_dtype=jnp.bfloat16, out_dtype=None):
    """Eval-mode ClassBlock forward.

    compute_dtype=bf16 (default) runs both GEMMs on the bf16 MXU path with f32
    accumulation and halves resident weight bytes; compute_dtype=f32 matches
    the reference tightly. out_dtype=bf16 additionally halves the streamed
    output bytes (the kernel is HBM-bound at realistic sizes).
    """
    if out_dtype is None:
        out_dtype = jnp.float32
    B, D = x.shape
    NB = params["w1"].shape[1]
    C = params["w2"].shape[1]

    # --- fold eval-mode BatchNorm1d into the first Linear (fold done in f32) ---
    scale = params["gamma"] * jax.lax.rsqrt(params["var"] + BN_EPS)      # (1, NB)
    w1f = (params["w1"] * scale).astype(compute_dtype)                    # (D, NB)
    b1f = ((params["b1"] - params["mean"]) * scale + params["beta"]).astype(jnp.float32)

    # --- pad class dim: lane-dense output stores + full MXU N tiles.
    #     256-wide alignment for realistic class counts (v6e/v7x 2x256 MXU);
    #     128 is enough for tiny class counts / v5e. Wrapper slices back. ---
    lane = 128 if C <= 128 else 256
    Cp = _round_up(C, lane)
    # Optionally tile the class dim: keeps w2 / out tiles inside v7x's 64 MiB
    # VMEM for very large class_num without shrinking the batch tile.
    tile_c = _round_up(tile_c, 256)
    if Cp > tile_c:
        Cp = _round_up(Cp, tile_c)
        tc = tile_c
    else:
        tc = Cp
    n_c = Cp // tc

    w2p = jnp.zeros((NB, Cp), compute_dtype).at[:, :C].set(
        params["w2"].astype(compute_dtype))
    b2p = jnp.zeros((1, Cp), jnp.float32).at[:, :C].set(params["b2"])

    # --- batch tiling: big tiles amortize per-step overhead, but keep >= 2
    #     grid steps when B allows it (v7x: shard the "parallel" axis across
    #     both TensorCores). bf16 packs 16 sublanes/vreg -> prefer tb % 16 == 0
    #     on the bf16 path. x is NOT padded in the wrapper: the ragged last
    #     tile is handled by Pallas OOB read padding / masked output stores. ---
    sub = 16 if jnp.dtype(compute_dtype) == jnp.dtype(jnp.bfloat16) else 8
    tb = min(_round_up(tile_b, sub), _round_up(pl.cdiv(B, 2), sub))
    tb = min(max(tb, sub), _round_up(B, 8))      # never exceed the 8-aligned batch
    n_b = pl.cdiv(B, tb)

    x_isz = jnp.dtype(x.dtype).itemsize
    c_isz = jnp.dtype(compute_dtype).itemsize
    o_isz = jnp.dtype(out_dtype).itemsize

    cost = pl.CostEstimate(
        flops=2 * n_b * tb * NB * (n_c * D + Cp),
        transcendentals=0,
        bytes_accessed=(B * D * x_isz                 # x streamed once
                        + D * NB * c_isz + NB * 4     # w1, b1 (BN-folded, resident)
                        + NB * Cp * c_isz + Cp * 4    # w2, b2 (padded)
                        + B * Cp * o_isz),            # out
    )

    def build(single_buffer_resident):
        def resident(shape, imap, invariant):
            # Grid-invariant operands don't need the default double buffer:
            # single-buffering halves their resident VMEM (headroom on v7x/v5e).
            if single_buffer_resident and invariant:
                return pl.BlockSpec(shape, imap, pipeline_mode=pl.Buffered(1))
            return pl.BlockSpec(shape, imap)

        wbuf1 = 1 if single_buffer_resident else 2
        wbuf2 = 1 if (single_buffer_resident and n_c == 1) else 2
        # Size the scoped VMEM limit from the actual buffers + intermediates,
        # with headroom; clamp well under physical VMEM.
        vmem_need = (2 * tb * D * x_isz + tb * D * c_isz          # x tiles + cast
                     + wbuf1 * (D * NB * c_isz + NB * 4)          # w1, b1
                     + wbuf2 * (NB * tc * c_isz + tc * 4)         # w2, b2
                     + 2 * tb * tc * o_isz                        # out tiles
                     + tb * NB * (4 + c_isz) + tb * tc * 4)       # h (f32 + cast), out f32
        vmem_limit = int(min(max(32 << 20, vmem_need * 5 // 4 + (2 << 20)),
                             100 << 20))

        return pl.pallas_call(
            classblock_kernel,
            out_shape=jax.ShapeDtypeStruct((B, Cp), out_dtype),
            grid_spec=pl.GridSpec(
                grid=(n_b, n_c),
                in_specs=[
                    pl.BlockSpec((tb, D), lambda i, j: (i, 0)),         # x tile (pipelined)
                    resident((D, NB), lambda i, j: (0, 0), True),       # w1 (VMEM-resident)
                    resident((1, NB), lambda i, j: (0, 0), True),       # b1
                    resident((NB, tc), lambda i, j: (0, j), n_c == 1),  # w2
                    resident((1, tc), lambda i, j: (0, j), n_c == 1),   # b2
                ],
                out_specs=pl.BlockSpec((tb, tc), lambda i, j: (i, j)),
            ),
            compiler_params=pltpu.CompilerParams(
                # Batch/class tiles are independent: shard across TCs on v7x.
                dimension_semantics=("parallel", "parallel"),
                vmem_limit_bytes=vmem_limit),
            cost_estimate=cost,
        )

    try:
        out = build(True)(x, w1f, b1f, w2p, b2p)
    except Exception:
        # pl.Buffered(1) not supported by this jax build: fall back to the
        # default double-buffered specs (same semantics, slightly more VMEM).
        out = build(False)(x, w1f, b1f, w2p, b2p)

    return out[:, :C]


def init_class_block_params(key, input_dim, class_num, num_bottleneck=256):
    k1, k2, k3 = jax.random.split(key, 3)
    # Linear1: kaiming_normal_(a=0, mode='fan_out') -> std = sqrt(2 / out_features)
    std1 = (2.0 / num_bottleneck) ** 0.5
    w1 = std1 * jax.random.normal(k1, (input_dim, num_bottleneck), jnp.float32)
    b1 = jnp.zeros((1, num_bottleneck), jnp.float32)
    # BatchNorm1d: weight ~ N(1.0, 0.02), bias = 0, running stats fresh (0, 1)
    gamma = 1.0 + 0.02 * jax.random.normal(k2, (1, num_bottleneck), jnp.float32)
    beta = jnp.zeros((1, num_bottleneck), jnp.float32)
    mean = jnp.zeros((1, num_bottleneck), jnp.float32)
    var = jnp.ones((1, num_bottleneck), jnp.float32)
    # classifier Linear: weight ~ N(0, 0.001), bias = 0
    w2 = 0.001 * jax.random.normal(k3, (num_bottleneck, class_num), jnp.float32)
    b2 = jnp.zeros((1, class_num), jnp.float32)
    return dict(w1=w1, b1=b1, gamma=gamma, beta=beta, mean=mean, var=var,
                w2=w2, b2=b2)


def class_block_ref(x, p):
    h = x @ p["w1"] + p["b1"]
    h = (h - p["mean"]) * (p["gamma"] / jnp.sqrt(p["var"] + BN_EPS)) + p["beta"]
    return h @ p["w2"] + p["b2"]


if __name__ == "__main__":
    key = jax.random.PRNGKey(0)
    kx, kp, kx2, kp2 = jax.random.split(key, 4)

    B, INPUT_DIM, CLASS_NUM, NUM_BOTTLENECK = 8, 32, 16, 256
    x = jax.random.normal(kx, (B, INPUT_DIM), jnp.float32)
    params = init_class_block_params(kp, INPUT_DIM, CLASS_NUM, NUM_BOTTLENECK)
    ref = class_block_ref(x, params)

    # Default fast path: bf16 MXU compute (f32 accumulation), f32 output.
    out_def = jax.block_until_ready(class_block_forward(x, params))
    assert out_def.shape == (B, CLASS_NUM)
    assert bool(jnp.all(jnp.isfinite(out_def)))
    assert jnp.allclose(out_def, ref, atol=5e-3, rtol=3e-2)

    # f32 compute path: tight match to the reference.
    out_f32 = jax.block_until_ready(
        class_block_forward(x, params, compute_dtype=jnp.float32))
    assert jnp.allclose(out_f32, ref, atol=1e-4, rtol=1e-4)

    # bf16 streamed output (halves output HBM bytes in the mem-bound regime).
    out_bf16o = jax.block_until_ready(
        class_block_forward(x, params, out_dtype=jnp.bfloat16))
    assert out_bf16o.dtype == jnp.bfloat16
    assert jnp.allclose(out_bf16o.astype(jnp.float32), ref, atol=1e-2, rtol=5e-2)

    # Multi-tile / ragged batch (>= 2 grid steps + masked last partial tile).
    B2 = 40
    x2 = jax.random.normal(kx2, (B2, INPUT_DIM), jnp.float32)
    ref2 = class_block_ref(x2, params)
    out2 = jax.block_until_ready(class_block_forward(x2, params, tile_b=16))
    assert out2.shape == (B2, CLASS_NUM)
    assert jnp.allclose(out2, ref2, atol=5e-3, rtol=3e-2)

    # Class-dim tiling path (n_c > 1), as used for very large class counts.
    params_big = init_class_block_params(kp2, INPUT_DIM, 300, NUM_BOTTLENECK)
    ref3 = class_block_ref(x, params_big)
    out3 = jax.block_until_ready(
        class_block_forward(x, params_big, tile_c=256))
    assert out3.shape == (B, 300)
    assert jnp.allclose(out3, ref3, atol=5e-3, rtol=3e-2)

    print("KERNEL_OK")
</pallas_src>

<mosaic_0001>
module attributes {stable_mosaic.version = 11 : i64} {
  func.func @classblock_kernel(%arg0: i32, %arg1: i32, %arg2: memref<8x32xf32, #tpu.memory_space<vmem>>, %arg3: memref<32x256xbf16, #tpu.memory_space<vmem>>, %arg4: memref<1x256xf32, #tpu.memory_space<vmem>>, %arg5: memref<256x128xbf16, #tpu.memory_space<vmem>>, %arg6: memref<1x128xf32, #tpu.memory_space<vmem>>, %arg7: memref<8x128xf32, #tpu.memory_space<vmem>>) attributes {dimension_semantics = [#tpu.dimension_semantics<parallel>, #tpu.dimension_semantics<parallel>], iteration_bounds = array<i64: 1, 1>, scalar_prefetch = 0 : i64, scratch_operands = 0 : i64, tpu.core_type = #tpu.core_type<tc>, window_params = [{transform_indices = @transform_0, window_bounds = array<i64: 8, 32>}, {pipeline_mode = #tpu.pipeline_mode<synchronous>, transform_indices = @transform_1, window_bounds = array<i64: 32, 256>}, {pipeline_mode = #tpu.pipeline_mode<synchronous>, transform_indices = @transform_2, window_bounds = array<i64: 1, 256>}, {pipeline_mode = #tpu.pipeline_mode<synchronous>, transform_indices = @transform_3, window_bounds = array<i64: 256, 128>}, {pipeline_mode = #tpu.pipeline_mode<synchronous>, transform_indices = @transform_4, window_bounds = array<i64: 1, 128>}, {transform_indices = @transform_5, window_bounds = array<i64: 8, 128>}]} {
    %c0 = arith.constant 0 : index
    %c0_0 = arith.constant 0 : index
    %0 = vector.load %arg2[%c0, %c0_0] : memref<8x32xf32, #tpu.memory_space<vmem>>, vector<8x32xf32>
    %1 = arith.truncf %0 : vector<8x32xf32> to vector<8x32xbf16>
    %c0_1 = arith.constant 0 : index
    %c0_2 = arith.constant 0 : index
    %2 = vector.load %arg3[%c0_1, %c0_2] : memref<32x256xbf16, #tpu.memory_space<vmem>>, vector<32x256xbf16>
    %cst = arith.constant dense<0.000000e+00> : vector<8x256xf32>
    %3 = tpu.matmul %1, %2, %cst {dimension_numbers = #tpu.dot_dimension_numbers<[1], [0], [0], [1], [0, 0, 1, 1], [], []>} : vector<8x32xbf16>, vector<32x256xbf16>, vector<8x256xf32> -> vector<8x256xf32>
    %c0_3 = arith.constant 0 : index
    %c0_4 = arith.constant 0 : index
    %4 = vector.load %arg4[%c0_3, %c0_4] : memref<1x256xf32, #tpu.memory_space<vmem>>, vector<1x256xf32>
    %5 = vector.broadcast %4 : vector<1x256xf32> to vector<8x256xf32>
    %6 = arith.addf %3, %5 : vector<8x256xf32>
    %7 = arith.truncf %6 : vector<8x256xf32> to vector<8x256xbf16>
    %c0_5 = arith.constant 0 : index
    %c0_6 = arith.constant 0 : index
    %8 = vector.load %arg5[%c0_5, %c0_6] : memref<256x128xbf16, #tpu.memory_space<vmem>>, vector<256x128xbf16>
    %cst_7 = arith.constant dense<0.000000e+00> : vector<8x128xf32>
    %9 = tpu.matmul %7, %8, %cst_7 {dimension_numbers = #tpu.dot_dimension_numbers<[1], [0], [0], [1], [0, 0, 1, 1], [], []>} : vector<8x256xbf16>, vector<256x128xbf16>, vector<8x128xf32> -> vector<8x128xf32>
    %c0_8 = arith.constant 0 : index
    %c0_9 = arith.constant 0 : index
    %10 = vector.load %arg6[%c0_8, %c0_9] : memref<1x128xf32, #tpu.memory_space<vmem>>, vector<1x128xf32>
    %11 = vector.broadcast %10 : vector<1x128xf32> to vector<8x128xf32>
    %12 = arith.addf %9, %11 : vector<8x128xf32>
    %c0_10 = arith.constant 0 : index
    %c0_11 = arith.constant 0 : index
    %13 = vector.load %arg7[%c0_10, %c0_11] : memref<8x128xf32, #tpu.memory_space<vmem>>, vector<8x128xf32>
    tpu.vector_store %arg7[%c0_10, %c0_11], %12 {strides = array<i32>} : memref<8x128xf32, #tpu.memory_space<vmem>>, vector<8x128xf32>,
    return
  }
  func.func @transform_0(%arg0: i32, %arg1: i32) -> (i32, i32) {
    %c0_i32 = arith.constant 0 : i32
    %c0_i32_0 = arith.constant 0 : i32
    return %arg0, %c0_i32 : i32, i32
  }
  func.func @transform_1(%arg0: i32, %arg1: i32) -> (i32, i32) {
    %c0_i32 = arith.constant 0 : i32
    %c0_i32_0 = arith.constant 0 : i32
    %c0_i32_1 = arith.constant 0 : i32
    return %c0_i32, %c0_i32_0 : i32, i32
  }
  func.func @transform_2(%arg0: i32, %arg1: i32) -> (i32, i32) {
    %c0_i32 = arith.constant 0 : i32
    %c0_i32_0 = arith.constant 0 : i32
    %c0_i32_1 = arith.constant 0 : i32
    return %c0_i32, %c0_i32_0 : i32, i32
  }
  func.func @transform_3(%arg0: i32, %arg1: i32) -> (i32, i32) {
    %c0_i32 = arith.constant 0 : i32
    %c0_i32_0 = arith.constant 0 : i32
    return %c0_i32, %arg1 : i32, i32
  }
  func.func @transform_4(%arg0: i32, %arg1: i32) -> (i32, i32) {
    %c0_i32 = arith.constant 0 : i32
    %c0_i32_0 = arith.constant 0 : i32
    return %c0_i32, %arg1 : i32, i32
  }
  func.func @transform_5(%arg0: i32, %arg1: i32) -> (i32, i32) {
    %c0_i32 = arith.constant 0 : i32
    return %arg0, %arg1 : i32, i32
  }
}

module attributes {stable_mosaic.version = 11 : i64} {
  func.func @classblock_kernel(%arg0: i32, %arg1: i32, %arg2: memref<8x32xf32, #tpu.memory_space<vmem>>, %arg3: memref<32x256xbf16, #tpu.memory_space<vmem>>, %arg4: memref<1x256xf32, #tpu.memory_space<vmem>>, %arg5: memref<256x128xbf16, #tpu.memory_space<vmem>>, %arg6: memref<1x128xf32, #tpu.memory_space<vmem>>, %arg7: memref<8x128xf32, #tpu.memory_space<vmem>>) attributes {dimension_semantics = [#tpu.dimension_semantics<parallel>, #tpu.dimension_semantics<parallel>], iteration_bounds = array<i64: 1, 1>, scalar_prefetch = 0 : i64, scratch_operands = 0 : i64, tpu.core_type = #tpu.core_type<tc>, window_params = [{transform_indices = @transform_0, window_bounds = array<i64: 8, 32>}, {pipeline_mode = #tpu.pipeline_mode<synchronous>, transform_indices = @transform_1, window_bounds = array<i64: 32, 256>}, {pipeline_mode = #tpu.pipeline_mode<synchronous>, transform_indices = @transform_2, window_bounds = array<i64: 1, 256>}, {transform_indices = @transform_3, window_bounds = array<i64: 256, 128>}, {transform_indices = @transform_4, window_bounds = array<i64: 1, 128>}, {transform_indices = @transform_5, window_bounds = array<i64: 8, 128>}]} {
    %c0 = arith.constant 0 : index
    %c0_0 = arith.constant 0 : index
    %0 = vector.load %arg2[%c0, %c0_0] : memref<8x32xf32, #tpu.memory_space<vmem>>, vector<8x32xf32>
    %1 = arith.truncf %0 : vector<8x32xf32> to vector<8x32xbf16>
    %c0_1 = arith.constant 0 : index
    %c0_2 = arith.constant 0 : index
    %2 = vector.load %arg3[%c0_1, %c0_2] : memref<32x256xbf16, #tpu.memory_space<vmem>>, vector<32x256xbf16>
    %cst = arith.constant dense<0.000000e+00> : vector<8x256xf32>
    %3 = tpu.matmul %1, %2, %cst {dimension_numbers = #tpu.dot_dimension_numbers<[1], [0], [0], [1], [0, 0, 1, 1], [], []>} : vector<8x32xbf16>, vector<32x256xbf16>, vector<8x256xf32> -> vector<8x256xf32>
    %c0_3 = arith.constant 0 : index
    %c0_4 = arith.constant 0 : index
    %4 = vector.load %arg4[%c0_3, %c0_4] : memref<1x256xf32, #tpu.memory_space<vmem>>, vector<1x256xf32>
    %5 = vector.broadcast %4 : vector<1x256xf32> to vector<8x256xf32>
    %6 = arith.addf %3, %5 : vector<8x256xf32>
    %7 = arith.truncf %6 : vector<8x256xf32> to vector<8x256xbf16>
    %c0_5 = arith.constant 0 : index
    %c0_6 = arith.constant 0 : index
    %8 = vector.load %arg5[%c0_5, %c0_6] : memref<256x128xbf16, #tpu.memory_space<vmem>>, vector<256x128xbf16>
    %cst_7 = arith.constant dense<0.000000e+00> : vector<8x128xf32>
    %9 = tpu.matmul %7, %8, %cst_7 {dimension_numbers = #tpu.dot_dimension_numbers<[1], [0], [0], [1], [0, 0, 1, 1], [], []>} : vector<8x256xbf16>, vector<256x128xbf16>, vector<8x128xf32> -> vector<8x128xf32>
    %c0_8 = arith.constant 0 : index
    %c0_9 = arith.constant 0 : index
    %10 = vector.load %arg6[%c0_8, %c0_9] : memref<1x128xf32, #tpu.memory_space<vmem>>, vector<1x128xf32>
    %11 = vector.broadcast %10 : vector<1x128xf32> to vector<8x128xf32>
    %12 = arith.addf %9, %11 : vector<8x128xf32>
    %c0_10 = arith.constant 0 : index
    %c0_11 = arith.constant 0 : index
    %13 = vector.load %arg7[%c0_10, %c0_11] : memref<8x128xf32, #tpu.memory_space<vmem>>, vector<8x128xf32>
    tpu.vector_store %arg7[%c0_10, %c0_11], %12 {strides = array<i32>} : memref<8x128xf32, #tpu.memory_space<vmem>>, vector<8x128xf32>,
    return
  }
  func.func @transform_0(%arg0: i32, %arg1: i32) -> (i32, i32) {
    %c0_i32 = arith.constant 0 : i32
    %c0_i32_0 = arith.constant 0 : i32
    return %arg0, %c0_i32 : i32, i32
  }
  func.func @transform_1(%arg0: i32, %arg1: i32) -> (i32, i32) {
    %c0_i32 = arith.constant 0 : i32
    %c0_i32_0 = arith.constant 0 : i32
    %c0_i32_1 = arith.constant 0 : i32
    return %c0_i32, %c0_i32_0 : i32, i32
  }
  func.func @transform_2(%arg0: i32, %arg1: i32) -> (i32, i32) {
    %c0_i32 = arith.constant 0 : i32
    %c0_i32_0 = arith.constant 0 : i32
    %c0_i32_1 = arith.constant 0 : i32
    return %c0_i32, %c0_i32_0 : i32, i32
  }
  func.func @transform_3(%arg0: i32, %arg1: i32) -> (i32, i32) {
    %c0_i32 = arith.constant 0 : i32
    %c0_i32_0 = arith.constant 0 : i32
    return %c0_i32, %arg1 : i32, i32
  }
  func.func @transform_4(%arg0: i32, %arg1: i32) -> (i32, i32) {
    %c0_i32 = arith.constant 0 : i32
    %c0_i32_0 = arith.constant 0 : i32
    return %c0_i32, %arg1 : i32, i32
  }
  func.func @transform_5(%arg0: i32, %arg1: i32) -> (i32, i32) {
    %c0_i32 = arith.constant 0 : i32
    return %arg0, %arg1 : i32, i32
  }
}

</mosaic_0001>

<llo_original>
// kernel: tpu_custom_call.1
$region0: #{tpu_custom_call.1}
  #allocation0 [shape = 'u32[]', space=smem, size = 0x4, offset = 0x4, fixed_abs, tag = 'smem constant byte address 0x4 - core index']
  #allocation1 [shape = 'u32[144,128]{1,0:T(1,128)}', space=vmem, size = 0x12000, scoped, tag = 'internal scratch']
  %s0 = inlined_call_operand.hbm [shape: f32[8,32], index: 0, kind: input, shape index: {}]
  %s1 = inlined_call_operand.hbm [shape: bf16[32,256], index: 1, kind: input, shape index: {}]
  %s2 = inlined_call_operand.vmem [shape: f32[1,256], index: 2, kind: input, shape index: {}]
  %s3 = inlined_call_operand.hbm [shape: bf16[256,128], index: 3, kind: input, shape index: {}]
  %s4 = inlined_call_operand.vmem [shape: f32[1,128], index: 4, kind: input, shape index: {}]
  %s5 = inlined_call_operand.hbm [shape: f32[8,128], index: 5, kind: output, shape index: {}]
  %s6 = sld [smem:[#allocation0]]
  $region42: #{tpu_custom_call.1} parent=0
    _
  %s8 = ssub.s32 1, %s6
  %s9 = scalar_select 0, %s8, %s6
  $region1: #{tpu_custom_call.1} parent=0
    #allocation2 [shape = 'u8[4096]{0}', space=vmem, size = 0x1000, scoped, tag = 'input window, operand 0, single buffered']
    #allocation3 [shape = 's32[1]{0}', space=sflag, size = 0x4, scoped, tag = 'scoped memory for tpu_custom_call.1']
    #allocation4 [shape = 's32[1]{0}', space=sflag, size = 0x4, scoped, tag = 'scoped memory for tpu_custom_call.1']
    #allocation5 [shape = 'u8[16384]{0}', space=vmem, size = 0x4000, scoped, tag = 'input window, operand 1, single buffered']
    #allocation6 [shape = 's32[1]{0}', space=sflag, size = 0x4, scoped, tag = 'scoped memory for tpu_custom_call.1']
    #allocation7 [shape = 'u8[65536]{0}', space=vmem, size = 0x10000, scoped, tag = 'input window, operand 3, single buffered']
    #allocation8 [shape = 'u8[4096]{0}', space=vmem, size = 0x1000, scoped, tag = 'output window, operand 0, single buffered']
    %10 = vsyncpa [#allocation3], 0
    %11 = vsyncpa [#allocation6], 0
    %12 = vsyncpa [#allocation4], 0
    // Predicated region
    $region2: #{tpu_custom_call.1} parent=1 // pred_check
      _
    $region3: #{tpu_custom_call.1} parent=1 // pred_check_branch
      %14 = sbr.rel (0) target = $region5
    $region4: #{tpu_custom_call.1} parent=1 // pred_region
      %s16 = ssub.s32 128, 128
      %17 = vsyncadd [#allocation3], %s16
      %s19 = sshll.u32 [#allocation2], 4
      %s20 = int_to_ptr.vmem [resolvable:$true] %s19
      %22 = dma.hbm_to_vmem [thread:$0]  %s0, 128, %s20, [#allocation3]
    $region5: #{tpu_custom_call.1} parent=1 // pred_fallthru
      _
    // Predicated region
    $region6: #{tpu_custom_call.1} parent=1 // pred_check
      _
    $region7: #{tpu_custom_call.1} parent=1 // pred_check_branch
      %24 = sbr.rel (0) target = $region9
    $region8: #{tpu_custom_call.1} parent=1 // pred_region
      %s26 = ssub.s32 512, 512
      %27 = vsyncadd [#allocation6], %s26
      %s28 = sshll.u32 [#allocation5], 4
      %s29 = int_to_ptr.vmem [resolvable:$true] %s28
      %34 = dma.hbm_to_vmem [thread:$0]  %s1, 512, %s29, [#allocation6], 128, 128, 8
    $region9: #{tpu_custom_call.1} parent=1 // pred_fallthru
      _
    // Predicated region
    $region10: #{tpu_custom_call.1} parent=1 // pred_check
      _
    $region11: #{tpu_custom_call.1} parent=1 // pred_check_branch
      %36 = sbr.rel (0) target = $region13
    $region12: #{tpu_custom_call.1} parent=1 // pred_region
      _
    $region13: #{tpu_custom_call.1} parent=1 // pred_fallthru
      _
    // Predicated region
    $region14: #{tpu_custom_call.1} parent=1 // pred_check
      _
    $region15: #{tpu_custom_call.1} parent=1 // pred_check_branch
      %38 = sbr.rel (0) target = $region17
    $region16: #{tpu_custom_call.1} parent=1 // pred_region
      %s40 = ssub.s32 2048, 2048
      %41 = vsyncadd [#allocation6], %s40
      %s42 = sshll.u32 [#allocation7], 4
      %s43 = int_to_ptr.vmem [resolvable:$true] %s42
      %48 = dma.hbm_to_vmem [thread:$0]  %s3, 2048, %s43, [#allocation6], 64, 64, 4
    $region17: #{tpu_custom_call.1} parent=1 // pred_fallthru
      _
    // Predicated region
    $region18: #{tpu_custom_call.1} parent=1 // pred_check
      _
    $region19: #{tpu_custom_call.1} parent=1 // pred_check_branch
      %50 = sbr.rel (0) target = $region21
    $region20: #{tpu_custom_call.1} parent=1 // pred_region
      _
    $region21: #{tpu_custom_call.1} parent=1 // pred_fallthru
      _
    // Predicated region
    $region22: #{tpu_custom_call.1} parent=1 // pred_check
      _
    $region23: #{tpu_custom_call.1} parent=1 // pred_check_branch
      %52 = sbr.rel (0) target = $region25
    $region24: #{tpu_custom_call.1} parent=1 // pred_region
      %53 = dma.done [#allocation3], 128
    $region25: #{tpu_custom_call.1} parent=1 // pred_fallthru
      _
    // Predicated region
    $region26: #{tpu_custom_call.1} parent=1 // pred_check
      _
    $region27: #{tpu_custom_call.1} parent=1 // pred_check_branch
      %55 = sbr.rel (0) target = $region29
    $region28: #{tpu_custom_call.1} parent=1 // pred_region
      %56 = dma.done [#allocation6], 512
    $region29: #{tpu_custom_call.1} parent=1 // pred_fallthru
      _
    // Predicated region
    $region30: #{tpu_custom_call.1} parent=1 // pred_check
      _
    $region31: #{tpu_custom_call.1} parent=1 // pred_check_branch
      %58 = sbr.rel (0) target = $region33
    $region32: #{tpu_custom_call.1} parent=1 // pred_region
      %59 = dma.done [#allocation6], 2048
    $region33: #{tpu_custom_call.1} parent=1 // pred_fallthru
      _
    %v61 = vld [vmem:[#allocation2] sm:$0xff]
    %v62 = vpack.c.bf16 %v61, %v61
    %v63 = vld [vmem:[#allocation5] sm:$0xff]
    %v64 = vld [vmem:[#allocation5 + $0x8] sm:$0xff]
    %v65 = vld [vmem:[#allocation5 + $0x10] sm:$0xff]
    %v66 = vld [vmem:[#allocation5 + $0x18] sm:$0xff]
    %v67 = vld [vmem:[%s2] sm:$0x3]
    %v69 = vlaneseq
    %v70 = vshrl.u32 %v69, 7
    %v71 = vsub.s32 0, %v70
    %v72 = vrot.slane %v67, %v71
    %v73 = vlaneseq
    %v74 = vshrl.u32 %v73, 7
    %v75 = vsub.s32 1, %v74
    %v76 = vrot.slane %v67, %v75
    %v83 = vunpack.c.l.b16 %v63
    %v84 = vunpack.c.h.b16 %v63
    %v85 = vunpack.c.l.b16 %v64
    %v86 = vunpack.c.h.b16 %v64
    %v87 = vunpack.c.l.b16 %v65
    %v88 = vunpack.c.h.b16 %v65
    %v89 = vunpack.c.l.b16 %v66
    %v90 = vunpack.c.h.b16 %v66
    %v91 = vpack.c.b16 %v85, %v83
    %v92 = vpack.c.b16 %v86, %v84
    %v93 = vpack.c.b16 %v89, %v87
    %v94 = vpack.c.b16 %v90, %v88
    %vm99 = vcmask 261120
    %v101 = vsel %vm99, %v62, 0
    %103 = vmatprep.subr.bf16.mxu0 %v92
    %104 = vmatpush1.bf16.msra.mxu0 %v91
    %105 = vmatprep.subr.bf16.mxu0 %v94
    %106 = vmatpush1.bf16.msra.mxu0 %v93
    %107 = vmatprep.subr.bf16.mxu0 0
    %108 = vmatpush1.bf16.msra.mxu0 0
    %109 = vmatprep.subr.bf16.mxu0 0
    %110 = vmatpush1.bf16.msra.mxu0 0
    %111 = vmatprep.subr.bf16.mxu0 0
    %112 = vmatpush1.bf16.msra.mxu0 0
    %113 = vmatprep.subr.bf16.mxu0 0
    %114 = vmatpush1.bf16.msra.mxu0 0
    %115 = vmatprep.subr.bf16.mxu0 0
    %116 = vmatpush1.bf16.msra.mxu0 0
    %117 = vmatprep.subr.bf16.mxu0 0
    %118 = vmatpush1.bf16.msra.mxu0 0
    %119 = vmatprep.subr.bf16.mxu0 0
    %120 = vmatpush1.bf16.msra.mxu0 0
    %121 = vmatprep.subr.bf16.mxu0 0
    %122 = vmatpush1.bf16.msra.mxu0 0
    %123 = vmatprep.subr.bf16.mxu0 0
    %124 = vmatpush1.bf16.msra.mxu0 0
    %125 = vmatprep.subr.bf16.mxu0 0
    %126 = vmatpush1.bf16.msra.mxu0 0
    %127 = vmatprep.subr.bf16.mxu0 0
    %128 = vmatpush1.bf16.msra.mxu0 0
    %129 = vmatprep.subr.bf16.mxu0 0
    %130 = vmatpush1.bf16.msra.mxu0 0
    %131 = vmatprep.subr.bf16.mxu0 0
    %132 = vmatpush1.bf16.msra.mxu0 0
    %133 = vmatprep.subr.bf16.mxu0 0
    %134 = vmatpush1.bf16.msra.mxu0 0
    %135 = vmatprep.mubr.bf16.mxu0 0
    %136 = vmatmul.mubr.bf16.gmra.mrb[0].mxu0 %v101
    %v137 = vpop.f32.mrb[0].mxu0
    %v138 = vadd.f32 %v72, %v137
    %v139 = vpop.f32.mrb[0].mxu0
    %v140 = vadd.f32 %v76, %v139
    %v141 = vpop.f32.mrb[0].mxu0
    %v142 = vpop.f32.mrb[0].mxu0
    %143 = vdwg.mxu0
    %v144 = vpack.c.bf16 %v138, %v138
    %v145 = vpack.c.bf16 %v140, %v140
    %v146 = vld [vmem:[#allocation7] sm:$0xf]
    %v147 = vld [vmem:[#allocation7 + $0x4] sm:$0xf]
    %v148 = vld [vmem:[#allocation7 + $0x8] sm:$0xf]
    %v149 = vld [vmem:[#allocation7 + $0xc] sm:$0xf]
    %v150 = vld [vmem:[#allocation7 + $0x10] sm:$0xf]
    %v151 = vld [vmem:[#allocation7 + $0x14] sm:$0xf]
    %v152 = vld [vmem:[#allocation7 + $0x18] sm:$0xf]
    %v153 = vld [vmem:[#allocation7 + $0x1c] sm:$0xf]
    %v154 = vld [vmem:[#allocation7 + $0x20] sm:$0xf]
    %v155 = vld [vmem:[#allocation7 + $0x24] sm:$0xf]
    %v156 = vld [vmem:[#allocation7 + $0x28] sm:$0xf]
    %v157 = vld [vmem:[#allocation7 + $0x2c] sm:$0xf]
    %v158 = vld [vmem:[#allocation7 + $0x30] sm:$0xf]
    %v159 = vld [vmem:[#allocation7 + $0x34] sm:$0xf]
    %v160 = vld [vmem:[#allocation7 + $0x38] sm:$0xf]
    %v161 = vld [vmem:[#allocation7 + $0x3c] sm:$0xf]
    %v162 = vld [vmem:[#allocation7 + $0x40] sm:$0xf]
    %v163 = vld [vmem:[#allocation7 + $0x44] sm:$0xf]
    %v164 = vld [vmem:[#allocation7 + $0x48] sm:$0xf]
    %v165 = vld [vmem:[#allocation7 + $0x4c] sm:$0xf]
    %v166 = vld [vmem:[#allocation7 + $0x50] sm:$0xf]
    %v167 = vld [vmem:[#allocation7 + $0x54] sm:$0xf]
    %v168 = vld [vmem:[#allocation7 + $0x58] sm:$0xf]
    %v169 = vld [vmem:[#allocation7 + $0x5c] sm:$0xf]
    %v170 = vld [vmem:[#allocation7 + $0x60] sm:$0xf]
    %v171 = vld [vmem:[#allocation7 + $0x64] sm:$0xf]
    %v172 = vld [vmem:[#allocation7 + $0x68] sm:$0xf]
    %v173 = vld [vmem:[#allocation7 + $0x6c] sm:$0xf]
    %v174 = vld [vmem:[#allocation7 + $0x70] sm:$0xf]
    %v175 = vld [vmem:[#allocation7 + $0x74] sm:$0xf]
    %v176 = vld [vmem:[#allocation7 + $0x78] sm:$0xf]
    %v177 = vld [vmem:[#allocation7 + $0x7c] sm:$0xf]
    %v178 = vld [vmem:[%s4] sm:$0x1]
    %v180 = vlaneseq
    %v181 = vshrl.u32 %v180, 7
    %v182 = vsub.s32 0, %v181
    %v183 = vrot.slane %v178, %v182
    %v217 = vunpack.c.l.b16 %v146
    %v218 = vunpack.c.l.b16 %v147
    %v219 = vunpack.c.l.b16 %v148
    %v220 = vunpack.c.l.b16 %v149
    %v221 = vunpack.c.l.b16 %v150
    %v222 = vunpack.c.l.b16 %v151
    %v223 = vunpack.c.l.b16 %v152
    %v224 = vunpack.c.l.b16 %v153
    %v225 = vunpack.c.l.b16 %v154
    %v226 = vunpack.c.l.b16 %v155
    %v227 = vunpack.c.l.b16 %v156
    %v228 = vunpack.c.l.b16 %v157
    %v229 = vunpack.c.l.b16 %v158
    %v230 = vunpack.c.l.b16 %v159
    %v231 = vunpack.c.l.b16 %v160
    %v232 = vunpack.c.l.b16 %v161
    %v233 = vunpack.c.l.b16 %v162
    %v234 = vunpack.c.l.b16 %v163
    %v235 = vunpack.c.l.b16 %v164
    %v236 = vunpack.c.l.b16 %v165
    %v237 = vunpack.c.l.b16 %v166
    %v238 = vunpack.c.l.b16 %v167
    %v239 = vunpack.c.l.b16 %v168
    %v240 = vunpack.c.l.b16 %v169
    %v241 = vunpack.c.l.b16 %v170
    %v242 = vunpack.c.l.b16 %v171
    %v243 = vunpack.c.l.b16 %v172
    %v244 = vunpack.c.l.b16 %v173
    %v245 = vunpack.c.l.b16 %v174
    %v246 = vunpack.c.l.b16 %v175
    %v247 = vunpack.c.l.b16 %v176
    %v248 = vunpack.c.l.b16 %v177
    %v249 = vpack.c.b16 %v218, %v217
    %v250 = vpack.c.b16 %v220, %v219
    %v251 = vpack.c.b16 %v222, %v221
    %v252 = vpack.c.b16 %v224, %v223
    %v253 = vpack.c.b16 %v226, %v225
    %v254 = vpack.c.b16 %v228, %v227
    %v255 = vpack.c.b16 %v230, %v229
    %v256 = vpack.c.b16 %v232, %v231
    %v257 = vpack.c.b16 %v234, %v233
    %v258 = vpack.c.b16 %v236, %v235
    %v259 = vpack.c.b16 %v238, %v237
    %v260 = vpack.c.b16 %v240, %v239
    %v261 = vpack.c.b16 %v242, %v241
    %v262 = vpack.c.b16 %v244, %v243
    %v263 = vpack.c.b16 %v246, %v245
    %v264 = vpack.c.b16 %v248, %v247
    %281 = vmatprep.subr.bf16.mxu0 0
    %282 = vmatpush1.bf16.msra.mxu0 %v249
    %283 = vmatprep.subr.bf16.mxu0 0
    %284 = vmatpush1.bf16.msra.mxu0 %v250
    %285 = vmatprep.subr.bf16.mxu0 0
    %286 = vmatpush1.bf16.msra.mxu0 %v251
    %287 = vmatprep.subr.bf16.mxu0 0
    %288 = vmatpush1.bf16.msra.mxu0 %v252
    %289 = vmatprep.subr.bf16.mxu0 0
    %290 = vmatpush1.bf16.msra.mxu0 %v253
    %291 = vmatprep.subr.bf16.mxu0 0
    %292 = vmatpush1.bf16.msra.mxu0 %v254
    %293 = vmatprep.subr.bf16.mxu0 0
    %294 = vmatpush1.bf16.msra.mxu0 %v255
    %295 = vmatprep.subr.bf16.mxu0 0
    %296 = vmatpush1.bf16.msra.mxu0 %v256
    %297 = vmatprep.subr.bf16.mxu0 0
    %298 = vmatpush1.bf16.msra.mxu0 %v257
    %299 = vmatprep.subr.bf16.mxu0 0
    %300 = vmatpush1.bf16.msra.mxu0 %v258
    %301 = vmatprep.subr.bf16.mxu0 0
    %302 = vmatpush1.bf16.msra.mxu0 %v259
    %303 = vmatprep.subr.bf16.mxu0 0
    %304 = vmatpush1.bf16.msra.mxu0 %v260
    %305 = vmatprep.subr.bf16.mxu0 0
    %306 = vmatpush1.bf16.msra.mxu0 %v261
    %307 = vmatprep.subr.bf16.mxu0 0
    %308 = vmatpush1.bf16.msra.mxu0 %v262
    %309 = vmatprep.subr.bf16.mxu0 0
    %310 = vmatpush1.bf16.msra.mxu0 %v263
    %311 = vmatprep.subr.bf16.mxu0 0
    %312 = vmatpush1.bf16.msra.mxu0 %v264
    %313 = vmatprep.mubr.bf16.mxu0 %v145
    %314 = vmatmul.mubr.bf16.gmra.mrb[0].mxu0 %v144
    %v315 = vpop.f32.mrb[0].mxu0
    %v316 = vadd.f32 %v183, %v315
    %v317 = vpop.f32.mrb[0].mxu0
    %v318 = vpop.f32.mrb[0].mxu0
    %v319 = vpop.f32.mrb[0].mxu0
    %320 = vdwg.mxu0
    %321 = vst [vmem:[#allocation8] sm:$0xff] %v316
    // Predicated region
    $region34: #{tpu_custom_call.1} parent=1 // pred_check
      _
    $region35: #{tpu_custom_call.1} parent=1 // pred_check_branch
      %323 = sbr.rel (0) target = $region37
    $region36: #{tpu_custom_call.1} parent=1 // pred_region
      %s325 = ssub.s32 128, 128
      %326 = vsyncadd [#allocation4], %s325
      %s328 = sshll.u32 [#allocation8], 4
      %s329 = int_to_ptr.vmem [resolvable:$true] %s328
      %331 = dma.vmem_to_hbm [thread:$0]  %s329, 128, %s5, [#allocation4]
    $region37: #{tpu_custom_call.1} parent=1 // pred_fallthru
      _
    // Predicated region
    $region38: #{tpu_custom_call.1} parent=1 // pred_check
      _
    $region39: #{tpu_custom_call.1} parent=1 // pred_check_branch
      %333 = sbr.rel (0) target = $region41
    $region40: #{tpu_custom_call.1} parent=1 // pred_region
      %334 = dma.done [#allocation4], 128
    $region41: #{tpu_custom_call.1} parent=1 // pred_fallthru
      _
    %335 = vsyncpa [#allocation3], 1
    %336 = vsyncpa [#allocation6], 1
    %337 = vsyncpa [#allocation4], 1

// kernel: tpu_custom_call.1
$region0: #{tpu_custom_call.1}
  #allocation0 [shape = 'u32[]', space=smem, size = 0x4, offset = 0x4, fixed_abs, tag = 'smem constant byte address 0x4 - core index']
  #allocation1 [shape = 'u32[144,128]{1,0:T(1,128)}', space=vmem, size = 0x12000, scoped, tag = 'internal scratch']
  %s0 = inlined_call_operand.hbm [shape: f32[8,32], index: 0, kind: input, shape index: {}]
  %s1 = inlined_call_operand.hbm [shape: bf16[32,256], index: 1, kind: input, shape index: {}]
  %s2 = inlined_call_operand.vmem [shape: f32[1,256], index: 2, kind: input, shape index: {}]
  %s3 = inlined_call_operand.hbm [shape: bf16[256,128], index: 3, kind: input, shape index: {}]
  %s4 = inlined_call_operand.vmem [shape: f32[1,128], index: 4, kind: input, shape index: {}]
  %s5 = inlined_call_operand.hbm [shape: f32[8,128], index: 5, kind: output, shape index: {}]
  %s6 = sld [smem:[#allocation0]]
  $region42: #{tpu_custom_call.1} parent=0
    _
  %s8 = ssub.s32 1, %s6
  %s9 = scalar_select 0, %s8, %s6
  $region1: #{tpu_custom_call.1} parent=0
    #allocation2 [shape = 'u8[4096]{0}', space=vmem, size = 0x1000, scoped, tag = 'input window, operand 0, single buffered']
    #allocation3 [shape = 's32[1]{0}', space=sflag, size = 0x4, scoped, tag = 'scoped memory for tpu_custom_call.1']
    #allocation4 [shape = 's32[1]{0}', space=sflag, size = 0x4, scoped, tag = 'scoped memory for tpu_custom_call.1']
    #allocation5 [shape = 'u8[16384]{0}', space=vmem, size = 0x4000, scoped, tag = 'input window, operand 1, single buffered']
    #allocation6 [shape = 's32[1]{0}', space=sflag, size = 0x4, scoped, tag = 'scoped memory for tpu_custom_call.1']
    #allocation7 [shape = 'u8[65536]{0}', space=vmem, size = 0x10000, scoped, tag = 'input window, operand 3, single buffered']
    #allocation8 [shape = 'u8[4096]{0}', space=vmem, size = 0x1000, scoped, tag = 'output window, operand 0, single buffered']
    %10 = vsyncpa [#allocation3], 0
    %11 = vsyncpa [#allocation6], 0
    %12 = vsyncpa [#allocation4], 0
    // Predicated region
    $region2: #{tpu_custom_call.1} parent=1 // pred_check
      _
    $region3: #{tpu_custom_call.1} parent=1 // pred_check_branch
      %14 = sbr.rel (0) target = $region5
    $region4: #{tpu_custom_call.1} parent=1 // pred_region
      %s16 = ssub.s32 128, 128
      %17 = vsyncadd [#allocation3], %s16
      %s19 = sshll.u32 [#allocation2], 4
      %s20 = int_to_ptr.vmem [resolvable:$true] %s19
      %22 = dma.hbm_to_vmem [thread:$0]  %s0, 128, %s20, [#allocation3]
    $region5: #{tpu_custom_call.1} parent=1 // pred_fallthru
      _
    // Predicated region
    $region6: #{tpu_custom_call.1} parent=1 // pred_check
      _
    $region7: #{tpu_custom_call.1} parent=1 // pred_check_branch
      %24 = sbr.rel (0) target = $region9
    $region8: #{tpu_custom_call.1} parent=1 // pred_region
      %s26 = ssub.s32 512, 512
      %27 = vsyncadd [#allocation6], %s26
      %s28 = sshll.u32 [#allocation5], 4
      %s29 = int_to_ptr.vmem [resolvable:$true] %s28
      %34 = dma.hbm_to_vmem [thread:$0]  %s1, 512, %s29, [#allocation6], 128, 128, 8
    $region9: #{tpu_custom_call.1} parent=1 // pred_fallthru
      _
    // Predicated region
    $region10: #{tpu_custom_call.1} parent=1 // pred_check
      _
    $region11: #{tpu_custom_call.1} parent=1 // pred_check_branch
      %36 = sbr.rel (0) target = $region13
    $region12: #{tpu_custom_call.1} parent=1 // pred_region
      _
    $region13: #{tpu_custom_call.1} parent=1 // pred_fallthru
      _
    // Predicated region
    $region14: #{tpu_custom_call.1} parent=1 // pred_check
      _
    $region15: #{tpu_custom_call.1} parent=1 // pred_check_branch
      %38 = sbr.rel (0) target = $region17
    $region16: #{tpu_custom_call.1} parent=1 // pred_region
      %s40 = ssub.s32 2048, 2048
      %41 = vsyncadd [#allocation6], %s40
      %s42 = sshll.u32 [#allocation7], 4
      %s43 = int_to_ptr.vmem [resolvable:$true] %s42
      %48 = dma.hbm_to_vmem [thread:$0]  %s3, 2048, %s43, [#allocation6], 64, 64, 4
    $region17: #{tpu_custom_call.1} parent=1 // pred_fallthru
      _
    // Predicated region
    $region18: #{tpu_custom_call.1} parent=1 // pred_check
      _
    $region19: #{tpu_custom_call.1} parent=1 // pred_check_branch
      %50 = sbr.rel (0) target = $region21
    $region20: #{tpu_custom_call.1} parent=1 // pred_region
      _
    $region21: #{tpu_custom_call.1} parent=1 // pred_fallthru
      _
    // Predicated region
    $region22: #{tpu_custom_call.1} parent=1 // pred_check
      _
    $region23: #{tpu_custom_call.1} parent=1 // pred_check_branch
      %52 = sbr.rel (0) target = $region25
    $region24: #{tpu_custom_call.1} parent=1 // pred_region
      %53 = dma.done [#allocation3], 128
    $region25: #{tpu_custom_call.1} parent=1 // pred_fallthru
      _
    // Predicated region
    $region26: #{tpu_custom_call.1} parent=1 // pred_check
      _
    $region27: #{tpu_custom_call.1} parent=1 // pred_check_branch
      %55 = sbr.rel (0) target = $region29
    $region28: #{tpu_custom_call.1} parent=1 // pred_region
      %56 = dma.done [#allocation6], 512
    $region29: #{tpu_custom_call.1} parent=1 // pred_fallthru
      _
    // Predicated region
    $region30: #{tpu_custom_call.1} parent=1 // pred_check
      _
    $region31: #{tpu_custom_call.1} parent=1 // pred_check_branch
      %58 = sbr.rel (0) target = $region33
    $region32: #{tpu_custom_call.1} parent=1 // pred_region
      %59 = dma.done [#allocation6], 2048
    $region33: #{tpu_custom_call.1} parent=1 // pred_fallthru
      _
    %v61 = vld [vmem:[#allocation2] sm:$0xff]
    %v62 = vpack.c.bf16 %v61, %v61
    %v63 = vld [vmem:[#allocation5] sm:$0xff]
    %v64 = vld [vmem:[#allocation5 + $0x8] sm:$0xff]
    %v65 = vld [vmem:[#allocation5 + $0x10] sm:$0xff]
    %v66 = vld [vmem:[#allocation5 + $0x18] sm:$0xff]
    %v67 = vld [vmem:[%s2] sm:$0x3]
    %v69 = vlaneseq
    %v70 = vshrl.u32 %v69, 7
    %v71 = vsub.s32 0, %v70
    %v72 = vrot.slane %v67, %v71
    %v73 = vlaneseq
    %v74 = vshrl.u32 %v73, 7
    %v75 = vsub.s32 1, %v74
    %v76 = vrot.slane %v67, %v75
    %v83 = vunpack.c.l.b16 %v63
    %v84 = vunpack.c.h.b16 %v63
    %v85 = vunpack.c.l.b16 %v64
    %v86 = vunpack.c.h.b16 %v64
    %v87 = vunpack.c.l.b16 %v65
    %v88 = vunpack.c.h.b16 %v65
    %v89 = vunpack.c.l.b16 %v66
    %v90 = vunpack.c.h.b16 %v66
    %v91 = vpack.c.b16 %v85, %v83
    %v92 = vpack.c.b16 %v86, %v84
    %v93 = vpack.c.b16 %v89, %v87
    %v94 = vpack.c.b16 %v90, %v88
    %vm99 = vcmask 261120
    %v101 = vsel %vm99, %v62, 0
    %103 = vmatprep.subr.bf16.mxu0 %v92
    %104 = vmatpush1.bf16.msra.mxu0 %v91
    %105 = vmatprep.subr.bf16.mxu0 %v94
    %106 = vmatpush1.bf16.msra.mxu0 %v93
    %107 = vmatprep.subr.bf16.mxu0 0
    %108 = vmatpush1.bf16.msra.mxu0 0
    %109 = vmatprep.subr.bf16.mxu0 0
    %110 = vmatpush1.bf16.msra.mxu0 0
    %111 = vmatprep.subr.bf16.mxu0 0
    %112 = vmatpush1.bf16.msra.mxu0 0
    %113 = vmatprep.subr.bf16.mxu0 0
    %114 = vmatpush1.bf16.msra.mxu0 0
    %115 = vmatprep.subr.bf16.mxu0 0
    %116 = vmatpush1.bf16.msra.mxu0 0
    %117 = vmatprep.subr.bf16.mxu0 0
    %118 = vmatpush1.bf16.msra.mxu0 0
    %119 = vmatprep.subr.bf16.mxu0 0
    %120 = vmatpush1.bf16.msra.mxu0 0
    %121 = vmatprep.subr.bf16.mxu0 0
    %122 = vmatpush1.bf16.msra.mxu0 0
    %123 = vmatprep.subr.bf16.mxu0 0
    %124 = vmatpush1.bf16.msra.mxu0 0
    %125 = vmatprep.subr.bf16.mxu0 0
    %126 = vmatpush1.bf16.msra.mxu0 0
    %127 = vmatprep.subr.bf16.mxu0 0
    %128 = vmatpush1.bf16.msra.mxu0 0
    %129 = vmatprep.subr.bf16.mxu0 0
    %130 = vmatpush1.bf16.msra.mxu0 0
    %131 = vmatprep.subr.bf16.mxu0 0
    %132 = vmatpush1.bf16.msra.mxu0 0
    %133 = vmatprep.subr.bf16.mxu0 0
    %134 = vmatpush1.bf16.msra.mxu0 0
    %135 = vmatprep.mubr.bf16.mxu0 0
    %136 = vmatmul.mubr.bf16.gmra.mrb[0].mxu0 %v101
    %v137 = vpop.f32.mrb[0].mxu0
    %v138 = vadd.f32 %v72, %v137
    %v139 = vpop.f32.mrb[0].mxu0
    %v140 = vadd.f32 %v76, %v139
    %v141 = vpop.f32.mrb[0].mxu0
    %v142 = vpop.f32.mrb[0].mxu0
    %143 = vdwg.mxu0
    %v144 = vpack.c.bf16 %v138, %v138
    %v145 = vpack.c.bf16 %v140, %v140
    %v146 = vld [vmem:[#allocation7] sm:$0xf]
    %v147 = vld [vmem:[#allocation7 + $0x4] sm:$0xf]
    %v148 = vld [vmem:[#allocation7 + $0x8] sm:$0xf]
    %v149 = vld [vmem:[#allocation7 + $0xc] sm:$0xf]
    %v150 = vld [vmem:[#allocation7 + $0x10] sm:$0xf]
    %v151 = vld [vmem:[#allocation7 + $0x14] sm:$0xf]
    %v152 = vld [vmem:[#allocation7 + $0x18] sm:$0xf]
    %v153 = vld [vmem:[#allocation7 + $0x1c] sm:$0xf]
    %v154 = vld [vmem:[#allocation7 + $0x20] sm:$0xf]
    %v155 = vld [vmem:[#allocation7 + $0x24] sm:$0xf]
    %v156 = vld [vmem:[#allocation7 + $0x28] sm:$0xf]
    %v157 = vld [vmem:[#allocation7 + $0x2c] sm:$0xf]
    %v158 = vld [vmem:[#allocation7 + $0x30] sm:$0xf]
    %v159 = vld [vmem:[#allocation7 + $0x34] sm:$0xf]
    %v160 = vld [vmem:[#allocation7 + $0x38] sm:$0xf]
    %v161 = vld [vmem:[#allocation7 + $0x3c] sm:$0xf]
    %v162 = vld [vmem:[#allocation7 + $0x40] sm:$0xf]
    %v163 = vld [vmem:[#allocation7 + $0x44] sm:$0xf]
    %v164 = vld [vmem:[#allocation7 + $0x48] sm:$0xf]
    %v165 = vld [vmem:[#allocation7 + $0x4c] sm:$0xf]
    %v166 = vld [vmem:[#allocation7 + $0x50] sm:$0xf]
    %v167 = vld [vmem:[#allocation7 + $0x54] sm:$0xf]
    %v168 = vld [vmem:[#allocation7 + $0x58] sm:$0xf]
    %v169 = vld [vmem:[#allocation7 + $0x5c] sm:$0xf]
    %v170 = vld [vmem:[#allocation7 + $0x60] sm:$0xf]
    %v171 = vld [vmem:[#allocation7 + $0x64] sm:$0xf]
    %v172 = vld [vmem:[#allocation7 + $0x68] sm:$0xf]
    %v173 = vld [vmem:[#allocation7 + $0x6c] sm:$0xf]
    %v174 = vld [vmem:[#allocation7 + $0x70] sm:$0xf]
    %v175 = vld [vmem:[#allocation7 + $0x74] sm:$0xf]
    %v176 = vld [vmem:[#allocation7 + $0x78] sm:$0xf]
    %v177 = vld [vmem:[#allocation7 + $0x7c] sm:$0xf]
    %v178 = vld [vmem:[%s4] sm:$0x1]
    %v180 = vlaneseq
    %v181 = vshrl.u32 %v180, 7
    %v182 = vsub.s32 0, %v181
    %v183 = vrot.slane %v178, %v182
    %v217 = vunpack.c.l.b16 %v146
    %v218 = vunpack.c.l.b16 %v147
    %v219 = vunpack.c.l.b16 %v148
    %v220 = vunpack.c.l.b16 %v149
    %v221 = vunpack.c.l.b16 %v150
    %v222 = vunpack.c.l.b16 %v151
    %v223 = vunpack.c.l.b16 %v152
    %v224 = vunpack.c.l.b16 %v153
    %v225 = vunpack.c.l.b16 %v154
    %v226 = vunpack.c.l.b16 %v155
    %v227 = vunpack.c.l.b16 %v156
    %v228 = vunpack.c.l.b16 %v157
    %v229 = vunpack.c.l.b16 %v158
    %v230 = vunpack.c.l.b16 %v159
    %v231 = vunpack.c.l.b16 %v160
    %v232 = vunpack.c.l.b16 %v161
    %v233 = vunpack.c.l.b16 %v162
    %v234 = vunpack.c.l.b16 %v163
    %v235 = vunpack.c.l.b16 %v164
    %v236 = vunpack.c.l.b16 %v165
    %v237 = vunpack.c.l.b16 %v166
    %v238 = vunpack.c.l.b16 %v167
    %v239 = vunpack.c.l.b16 %v168
    %v240 = vunpack.c.l.b16 %v169
    %v241 = vunpack.c.l.b16 %v170
    %v242 = vunpack.c.l.b16 %v171
    %v243 = vunpack.c.l.b16 %v172
    %v244 = vunpack.c.l.b16 %v173
    %v245 = vunpack.c.l.b16 %v174
    %v246 = vunpack.c.l.b16 %v175
    %v247 = vunpack.c.l.b16 %v176
    %v248 = vunpack.c.l.b16 %v177
    %v249 = vpack.c.b16 %v218, %v217
    %v250 = vpack.c.b16 %v220, %v219
    %v251 = vpack.c.b16 %v222, %v221
    %v252 = vpack.c.b16 %v224, %v223
    %v253 = vpack.c.b16 %v226, %v225
    %v254 = vpack.c.b16 %v228, %v227
    %v255 = vpack.c.b16 %v230, %v229
    %v256 = vpack.c.b16 %v232, %v231
    %v257 = vpack.c.b16 %v234, %v233
    %v258 = vpack.c.b16 %v236, %v235
    %v259 = vpack.c.b16 %v238, %v237
    %v260 = vpack.c.b16 %v240, %v239
    %v261 = vpack.c.b16 %v242, %v241
    %v262 = vpack.c.b16 %v244, %v243
    %v263 = vpack.c.b16 %v246, %v245
    %v264 = vpack.c.b16 %v248, %v247
    %281 = vmatprep.subr.bf16.mxu0 0
    %282 = vmatpush1.bf16.msra.mxu0 %v249
    %283 = vmatprep.subr.bf16.mxu0 0
    %284 = vmatpush1.bf16.msra.mxu0 %v250
    %285 = vmatprep.subr.bf16.mxu0 0
    %286 = vmatpush1.bf16.msra.mxu0 %v251
    %287 = vmatprep.subr.bf16.mxu0 0
    %288 = vmatpush1.bf16.msra.mxu0 %v252
    %289 = vmatprep.subr.bf16.mxu0 0
    %290 = vmatpush1.bf16.msra.mxu0 %v253
    %291 = vmatprep.subr.bf16.mxu0 0
    %292 = vmatpush1.bf16.msra.mxu0 %v254
    %293 = vmatprep.subr.bf16.mxu0 0
    %294 = vmatpush1.bf16.msra.mxu0 %v255
    %295 = vmatprep.subr.bf16.mxu0 0
    %296 = vmatpush1.bf16.msra.mxu0 %v256
    %297 = vmatprep.subr.bf16.mxu0 0
    %298 = vmatpush1.bf16.msra.mxu0 %v257
    %299 = vmatprep.subr.bf16.mxu0 0
    %300 = vmatpush1.bf16.msra.mxu0 %v258
    %301 = vmatprep.subr.bf16.mxu0 0
    %302 = vmatpush1.bf16.msra.mxu0 %v259
    %303 = vmatprep.subr.bf16.mxu0 0
    %304 = vmatpush1.bf16.msra.mxu0 %v260
    %305 = vmatprep.subr.bf16.mxu0 0
    %306 = vmatpush1.bf16.msra.mxu0 %v261
    %307 = vmatprep.subr.bf16.mxu0 0
    %308 = vmatpush1.bf16.msra.mxu0 %v262
    %309 = vmatprep.subr.bf16.mxu0 0
    %310 = vmatpush1.bf16.msra.mxu0 %v263
    %311 = vmatprep.subr.bf16.mxu0 0
    %312 = vmatpush1.bf16.msra.mxu0 %v264
    %313 = vmatprep.mubr.bf16.mxu0 %v145
    %314 = vmatmul.mubr.bf16.gmra.mrb[0].mxu0 %v144
    %v315 = vpop.f32.mrb[0].mxu0
    %v316 = vadd.f32 %v183, %v315
    %v317 = vpop.f32.mrb[0].mxu0
    %v318 = vpop.f32.mrb[0].mxu0
    %v319 = vpop.f32.mrb[0].mxu0
    %320 = vdwg.mxu0
    %321 = vst [vmem:[#allocation8] sm:$0xff] %v316
    // Predicated region
    $region34: #{tpu_custom_call.1} parent=1 // pred_check
      _
    $region35: #{tpu_custom_call.1} parent=1 // pred_check_branch
      %323 = sbr.rel (0) target = $region37
    $region36: #{tpu_custom_call.1} parent=1 // pred_region
      %s325 = ssub.s32 128, 128
      %326 = vsyncadd [#allocation4], %s325
      %s328 = sshll.u32 [#allocation8], 4
      %s329 = int_to_ptr.vmem [resolvable:$true] %s328
      %331 = dma.vmem_to_hbm [thread:$0]  %s329, 128, %s5, [#allocation4]
    $region37: #{tpu_custom_call.1} parent=1 // pred_fallthru
      _
    // Predicated region
    $region38: #{tpu_custom_call.1} parent=1 // pred_check
      _
    $region39: #{tpu_custom_call.1} parent=1 // pred_check_branch
      %333 = sbr.rel (0) target = $region41
    $region40: #{tpu_custom_call.1} parent=1 // pred_region
      %334 = dma.done [#allocation4], 128
    $region41: #{tpu_custom_call.1} parent=1 // pred_fallthru
      _
    %335 = vsyncpa [#allocation3], 1
    %336 = vsyncpa [#allocation6], 1
    %337 = vsyncpa [#allocation4], 1

</llo_original>
